<compile_context>
chip_gen: v7x
topology: tpu7x:2x2x1
jax: 0.10.0
libtpu: 0.0.40
codegen_flags: <defaults>
</compile_context>

<pallas_src>
import functools
import numpy as np
import jax
import jax.numpy as jnp
from jax.experimental import pallas as pl
from jax.experimental.pallas import tpu as pltpu

TAU_SCALE = 50.0
LOG_STD_MIN, LOG_STD_MAX = -20.0, 2.0
LOG_STD_INIT = -3.0
_F32_MAX = float(np.finfo(np.float32).max)
_HALF_LOG_2PI = 0.5 * float(np.log(2.0 * np.pi))
_LOG_2 = float(np.log(2.0))


def _elu(x):
    # ELU(alpha=1); exp argument clamped at 0 so the discarded positive branch never overflows.
    return jnp.where(x > 0, x, jnp.exp(jnp.minimum(x, 0.0)) - 1.0)


def _softplus(z):
    # numerically stable softplus, matches F.softplus
    return jnp.maximum(z, 0.0) + jnp.log1p(jnp.exp(-jnp.abs(z)))


def _sac_actor_kernel(obs_dim, A, H, xin_ref, w1_ref, w2_ref, wh_ref, b_ref, out_ref):
    # fused input slab: rows [0, obs_dim) = obs^T, rows [obs_dim, obs_dim+A) = eps^T
    x = xin_ref[0:obs_dim, :]
    eps = xin_ref[obs_dim:obs_dim + A, :]

    # torch.nan_to_num(obs, nan=0.0): NaN -> 0, +/-inf -> +/- float32 max
    x = jnp.where(jnp.isnan(x), 0.0, x)
    x = jnp.clip(x, -_F32_MAX, _F32_MAX)

    # stacked bias column: [b1 ; b2 ; b_mu | b_log_std], each [rows, 1], lane-broadcast
    b1 = b_ref[0:H, :]
    b2 = b_ref[H:2 * H, :]
    bh = b_ref[2 * H:2 * H + 2 * A, :]

    # latent_pi: (Linear + ELU) x 2, feature-major ([H, TB] activations, batch on lanes)
    h1 = _elu(jnp.dot(w1_ref[...], x, preferred_element_type=jnp.float32) + b1)
    h2 = _elu(jnp.dot(w2_ref[...], h1, preferred_element_type=jnp.float32) + b2)

    # fused mu | log_std head (one MXU push), split along sublanes
    head = jnp.dot(wh_ref[...], h2, preferred_element_type=jnp.float32) + bh
    mean = head[0:A, :]
    log_std = jnp.clip(head[A:2 * A, :], LOG_STD_MIN, LOG_STD_MAX)
    std = jnp.exp(log_std)

    # reparameterized sample (rsample): a_raw = mean + std * eps
    a_raw = mean + std * eps
    a_tanh = jnp.tanh(a_raw)

    act = a_tanh * TAU_SCALE
    pen = -0.01 * jnp.sum(a_tanh * a_tanh, axis=0, keepdims=True)

    # Normal(mean, std).log_prob(a_raw).sum over actions, using (a_raw - mean)/std == eps,
    # minus the exact tanh-squash correction 2*(log2 - a - softplus(-2a)).
    lp = jnp.sum(-0.5 * eps * eps - log_std - _HALF_LOG_2PI, axis=0, keepdims=True)
    corr = 2.0 * (_LOG_2 - a_raw - _softplus(-2.0 * a_raw))
    lp = lp - jnp.sum(corr, axis=0, keepdims=True)

    # single dense, unmasked store: rows = [actions | log_prob | penalty | zero pad]
    tb = out_ref.shape[1]
    pad_rows = out_ref.shape[0] - (A + 2)
    pieces = [act, lp, pen]
    if pad_rows > 0:
        pieces.append(jnp.zeros((pad_rows, tb), jnp.float32))
    out_ref[...] = jnp.concatenate(pieces, axis=0)


def pack_params(params):
    """One-time repack into the feature-major layout the kernel consumes."""
    w1, b1, w2, b2, wmu, bmu, wls, bls = params        # w*: [in, out], b*: [1, out]
    w1t = jnp.asarray(w1).T                             # [H, obs_dim]
    w2t = jnp.asarray(w2).T                             # [H, H]
    wht = jnp.concatenate([wmu, wls], axis=1).T         # [2A, H]  fused mu|log_std head
    b_all = jnp.concatenate([b1, b2, bmu, bls], axis=1).T  # [2H + 2A, 1] stacked biases
    return w1t, w2t, wht, b_all


def _batch_tiling(B):
    """Pick (tile_lanes, padded_batch): tiles <= 2048, >= 2 tiles for B >= 256 (v7x)."""
    if B < 256:
        return B, B                                    # single whole-batch tile
    TB = min(2048, ((pl.cdiv(B, 2) + 127) // 128) * 128)
    Bp = ((B + TB - 1) // TB) * TB
    return TB, Bp


def sac_policy_forward(obs, eps, packed):
    """Returns (actions_scaled [B,A], log_prob [B], action_penalty [B])."""
    w1t, w2t, wht, b_all = packed
    B, obs_dim = obs.shape
    H = w1t.shape[0]
    A = wht.shape[0] // 2

    OUT_ROWS = ((A + 2 + 7) // 8) * 8                   # pad output rows to sublane multiple
    D_IN = obs_dim + A

    TB, Bp = _batch_tiling(B)

    # feature-major fused input slab: [obs_dim + A, Bp] = [obs^T ; eps^T]
    xin = jnp.concatenate([obs, eps], axis=1).T
    if Bp != B:
        xin = jnp.pad(xin, ((0, 0), (0, Bp - B)))

    const = lambda a: pl.BlockSpec(a.shape, lambda i: (0, 0))

    out = pl.pallas_call(
        functools.partial(_sac_actor_kernel, obs_dim, A, H),
        out_shape=jax.ShapeDtypeStruct((OUT_ROWS, Bp), jnp.float32),
        grid=(Bp // TB,),
        in_specs=[
            pl.BlockSpec((D_IN, TB), lambda i: (0, i)),  # fused obs|eps (pipelined per tile)
            const(w1t),       # W1^T      (constant index -> VMEM-resident, DMA'd once)
            const(w2t),       # W2^T
            const(wht),       # fused mu|log_std head (transposed)
            const(b_all),     # stacked biases
        ],
        out_specs=pl.BlockSpec((OUT_ROWS, TB), lambda i: (0, i)),
        compiler_params=pltpu.CompilerParams(
            dimension_semantics=("parallel",)),
    )(xin, w1t, w2t, wht, b_all)

    actions = out[0:A, 0:B].T
    log_prob = out[A, 0:B]
    penalty = out[A + 1, 0:B]
    return actions, log_prob, penalty


def init_params(key, obs_dim, action_dim, hidden):
    """Deterministic synthetic init (shapes match the PyTorch module, weights transposed)."""
    ks = jax.random.split(key, 6)

    def lin(k, fan_in, fan_out, scale=1.0):
        return scale * jax.random.normal(k, (fan_in, fan_out), jnp.float32) / np.sqrt(fan_in)

    w1 = lin(ks[0], obs_dim, hidden, np.sqrt(2.0))
    b1 = jnp.zeros((1, hidden), jnp.float32)
    w2 = lin(ks[1], hidden, hidden, np.sqrt(2.0))
    b2 = jnp.zeros((1, hidden), jnp.float32)
    wmu = lin(ks[2], hidden, action_dim, 0.01)
    bmu = jnp.zeros((1, action_dim), jnp.float32)
    wls = lin(ks[3], hidden, action_dim, 1.0)
    bls = jnp.full((1, action_dim), LOG_STD_INIT, jnp.float32)  # nn.init.constant_(log_std.bias, -3)
    return (w1, b1, w2, b2, wmu, bmu, wls, bls)


def reference_forward(obs, eps, params):
    """Pure-JAX reference, batch-major (matches the PyTorch forward)."""
    w1, b1, w2, b2, wmu, bmu, wls, bls = params
    x = jnp.where(jnp.isnan(obs), 0.0, obs)
    x = jnp.clip(x, -_F32_MAX, _F32_MAX)
    z1 = x @ w1 + b1
    h1 = jnp.where(z1 > 0, z1, jnp.exp(jnp.minimum(z1, 0.0)) - 1.0)
    z2 = h1 @ w2 + b2
    h2 = jnp.where(z2 > 0, z2, jnp.exp(jnp.minimum(z2, 0.0)) - 1.0)
    mean = h2 @ wmu + bmu
    log_std = jnp.clip(h2 @ wls + bls, LOG_STD_MIN, LOG_STD_MAX)
    std = jnp.exp(log_std)
    a_raw = mean + std * eps
    a_tanh = jnp.tanh(a_raw)
    act = a_tanh * TAU_SCALE
    pen = -0.01 * jnp.sum(a_tanh ** 2, axis=-1)
    lp = jnp.sum(-0.5 * eps ** 2 - log_std - 0.5 * jnp.log(2 * jnp.pi), axis=-1)
    lp = lp - jnp.sum(2.0 * (jnp.log(2.0) - a_raw - jax.nn.softplus(-2.0 * a_raw)), axis=-1)
    return act, lp, pen


if __name__ == "__main__":
    # Small shapes consistent with the module: obs_dim=16, action_dim=8, hidden=32, batch=8.
    B, OBS_DIM, ACT_DIM, HIDDEN = 8, 16, 8, 32

    key = jax.random.PRNGKey(0)
    k_obs, k_eps, k_param = jax.random.split(key, 3)

    obs = jax.random.normal(k_obs, (B, OBS_DIM), jnp.float32)
    eps = jax.random.normal(k_eps, (B, ACT_DIM), jnp.float32)  # rsample noise
    params = init_params(k_param, OBS_DIM, ACT_DIM, HIDDEN)
    packed = pack_params(params)

    fwd = jax.jit(sac_policy_forward)
    actions, log_prob, penalty = fwd(obs, eps, packed)
    jax.block_until_ready((actions, log_prob, penalty))

    # sanity check against pure-JAX reference
    ref_a, ref_lp, ref_pen = reference_forward(obs, eps, params)
    assert np.allclose(np.asarray(actions), np.asarray(ref_a), atol=1e-4, rtol=1e-4)
    assert np.allclose(np.asarray(log_prob), np.asarray(ref_lp), atol=1e-4, rtol=1e-4)
    assert np.allclose(np.asarray(penalty), np.asarray(ref_pen), atol=1e-5, rtol=1e-4)

    print("KERNEL_OK")
</pallas_src>

<mosaic_0001>
module attributes {stable_mosaic.version = 11 : i64} {
  func.func @_sac_actor_kernel(%arg0: i32, %arg1: memref<24x8xf32, #tpu.memory_space<vmem>>, %arg2: memref<32x16xf32, #tpu.memory_space<vmem>>, %arg3: memref<32x32xf32, #tpu.memory_space<vmem>>, %arg4: memref<16x32xf32, #tpu.memory_space<vmem>>, %arg5: memref<80x1xf32, #tpu.memory_space<vmem>>, %arg6: memref<16x8xf32, #tpu.memory_space<vmem>>) attributes {dimension_semantics = [#tpu.dimension_semantics<parallel>], iteration_bounds = array<i64: 1>, scalar_prefetch = 0 : i64, scratch_operands = 0 : i64, tpu.core_type = #tpu.core_type<tc>, window_params = [{transform_indices = @transform_0, window_bounds = array<i64: 24, 8>}, {pipeline_mode = #tpu.pipeline_mode<synchronous>, transform_indices = @transform_1, window_bounds = array<i64: 32, 16>}, {pipeline_mode = #tpu.pipeline_mode<synchronous>, transform_indices = @transform_2, window_bounds = array<i64: 32, 32>}, {pipeline_mode = #tpu.pipeline_mode<synchronous>, transform_indices = @transform_3, window_bounds = array<i64: 16, 32>}, {pipeline_mode = #tpu.pipeline_mode<synchronous>, transform_indices = @transform_4, window_bounds = array<i64: 80, 1>}, {transform_indices = @transform_5, window_bounds = array<i64: 16, 8>}]} {
    %c0 = arith.constant 0 : index
    %c0_0 = arith.constant 0 : index
    %0 = vector.load %arg1[%c0, %c0_0] : memref<24x8xf32, #tpu.memory_space<vmem>>, vector<16x8xf32>
    %c16 = arith.constant 16 : index
    %c0_1 = arith.constant 0 : index
    %1 = vector.load %arg1[%c16, %c0_1] : memref<24x8xf32, #tpu.memory_space<vmem>>, vector<8x8xf32>
    %2 = arith.cmpf one, %0, %0 : vector<16x8xf32>
    %cst = arith.constant 0.000000e+00 : f32
    %3 = vector.broadcast %cst : f32 to vector<16x8xf32>
    %4 = arith.select %2, %3, %0 : vector<16x8xi1>, vector<16x8xf32>
    %cst_2 = arith.constant -3.40282347E+38 : f32
    %cst_3 = arith.constant 3.40282347E+38 : f32
    %5 = vector.broadcast %cst_2 : f32 to vector<16x8xf32>
    %6 = arith.maximumf %5, %4 : vector<16x8xf32>
    %7 = vector.broadcast %cst_3 : f32 to vector<16x8xf32>
    %8 = arith.minimumf %7, %6 : vector<16x8xf32>
    %c0_4 = arith.constant 0 : index
    %c0_5 = arith.constant 0 : index
    %9 = vector.load %arg5[%c0_4, %c0_5] : memref<80x1xf32, #tpu.memory_space<vmem>>, vector<32x1xf32>
    %c32 = arith.constant 32 : index
    %c0_6 = arith.constant 0 : index
    %10 = vector.load %arg5[%c32, %c0_6] : memref<80x1xf32, #tpu.memory_space<vmem>>, vector<32x1xf32>
    %c64 = arith.constant 64 : index
    %c0_7 = arith.constant 0 : index
    %11 = vector.load %arg5[%c64, %c0_7] : memref<80x1xf32, #tpu.memory_space<vmem>>, vector<16x1xf32>
    %c0_8 = arith.constant 0 : index
    %c0_9 = arith.constant 0 : index
    %12 = vector.load %arg2[%c0_8, %c0_9] : memref<32x16xf32, #tpu.memory_space<vmem>>, vector<32x16xf32>
    %cst_10 = arith.constant dense<0.000000e+00> : vector<32x8xf32>
    %13 = tpu.matmul %12, %8, %cst_10 {dimension_numbers = #tpu.dot_dimension_numbers<[1], [0], [0], [1], [0, 0, 1, 1], [], []>} : vector<32x16xf32>, vector<16x8xf32>, vector<32x8xf32> -> vector<32x8xf32>
    %14 = vector.broadcast %9 : vector<32x1xf32> to vector<32x8xf32>
    %15 = arith.addf %13, %14 : vector<32x8xf32>
    %cst_11 = arith.constant 0.000000e+00 : f32
    %16 = vector.broadcast %cst_11 : f32 to vector<32x8xf32>
    %17 = arith.cmpf ogt, %15, %16 : vector<32x8xf32>
    %cst_12 = arith.constant 0.000000e+00 : f32
    %18 = vector.broadcast %cst_12 : f32 to vector<32x8xf32>
    %19 = arith.minimumf %15, %18 : vector<32x8xf32>
    %20 = math.exp %19 : vector<32x8xf32>
    %cst_13 = arith.constant 1.000000e+00 : f32
    %21 = vector.broadcast %cst_13 : f32 to vector<32x8xf32>
    %22 = arith.subf %20, %21 : vector<32x8xf32>
    %23 = arith.select %17, %15, %22 : vector<32x8xi1>, vector<32x8xf32>
    %c0_14 = arith.constant 0 : index
    %c0_15 = arith.constant 0 : index
    %24 = vector.load %arg3[%c0_14, %c0_15] : memref<32x32xf32, #tpu.memory_space<vmem>>, vector<32x32xf32>
    %cst_16 = arith.constant dense<0.000000e+00> : vector<32x8xf32>
    %25 = tpu.matmul %24, %23, %cst_16 {dimension_numbers = #tpu.dot_dimension_numbers<[1], [0], [0], [1], [0, 0, 1, 1], [], []>} : vector<32x32xf32>, vector<32x8xf32>, vector<32x8xf32> -> vector<32x8xf32>
    %26 = vector.broadcast %10 : vector<32x1xf32> to vector<32x8xf32>
    %27 = arith.addf %25, %26 : vector<32x8xf32>
    %cst_17 = arith.constant 0.000000e+00 : f32
    %28 = vector.broadcast %cst_17 : f32 to vector<32x8xf32>
    %29 = arith.cmpf ogt, %27, %28 : vector<32x8xf32>
    %cst_18 = arith.constant 0.000000e+00 : f32
    %30 = vector.broadcast %cst_18 : f32 to vector<32x8xf32>
    %31 = arith.minimumf %27, %30 : vector<32x8xf32>
    %32 = math.exp %31 : vector<32x8xf32>
    %cst_19 = arith.constant 1.000000e+00 : f32
    %33 = vector.broadcast %cst_19 : f32 to vector<32x8xf32>
    %34 = arith.subf %32, %33 : vector<32x8xf32>
    %35 = arith.select %29, %27, %34 : vector<32x8xi1>, vector<32x8xf32>
    %c0_20 = arith.constant 0 : index
    %c0_21 = arith.constant 0 : index
    %36 = vector.load %arg4[%c0_20, %c0_21] : memref<16x32xf32, #tpu.memory_space<vmem>>, vector<16x32xf32>
    %cst_22 = arith.constant dense<0.000000e+00> : vector<16x8xf32>
    %37 = tpu.matmul %36, %35, %cst_22 {dimension_numbers = #tpu.dot_dimension_numbers<[1], [0], [0], [1], [0, 0, 1, 1], [], []>} : vector<16x32xf32>, vector<32x8xf32>, vector<16x8xf32> -> vector<16x8xf32>
    %38 = vector.broadcast %11 : vector<16x1xf32> to vector<16x8xf32>
    %39 = arith.addf %37, %38 : vector<16x8xf32>
    %40 = vector.extract_strided_slice %39 {offsets = [0, 0], sizes = [8, 8], strides = [1, 1]} : vector<16x8xf32> to vector<8x8xf32>
    %41 = vector.extract_strided_slice %39 {offsets = [8, 0], sizes = [8, 8], strides = [1, 1]} : vector<16x8xf32> to vector<8x8xf32>
    %cst_23 = arith.constant -2.000000e+01 : f32
    %cst_24 = arith.constant 2.000000e+00 : f32
    %42 = vector.broadcast %cst_23 : f32 to vector<8x8xf32>
    %43 = arith.maximumf %42, %41 : vector<8x8xf32>
    %44 = vector.broadcast %cst_24 : f32 to vector<8x8xf32>
    %45 = arith.minimumf %44, %43 : vector<8x8xf32>
    %46 = math.exp %45 : vector<8x8xf32>
    %47 = arith.mulf %46, %1 : vector<8x8xf32>
    %48 = arith.addf %40, %47 : vector<8x8xf32>
    %49 = math.tanh %48 : vector<8x8xf32>
    %cst_25 = arith.constant 5.000000e+01 : f32
    %50 = vector.broadcast %cst_25 : f32 to vector<8x8xf32>
    %51 = arith.mulf %49, %50 : vector<8x8xf32>
    %52 = arith.mulf %49, %49 : vector<8x8xf32>
    %cst_26 = arith.constant dense<0.000000e+00> : vector<8xf32>
    %53 = vector.multi_reduction <add>, %52, %cst_26 [0] : vector<8x8xf32> to vector<8xf32>
    %54 = vector.shape_cast %53 : vector<8xf32> to vector<1x8xf32>
    %cst_27 = arith.constant -0.00999999977 : f32
    %55 = vector.broadcast %cst_27 : f32 to vector<1x8xf32>
    %56 = arith.mulf %55, %54 : vector<1x8xf32>
    %cst_28 = arith.constant -5.000000e-01 : f32
    %57 = vector.broadcast %cst_28 : f32 to vector<8x8xf32>
    %58 = arith.mulf %57, %1 : vector<8x8xf32>
    %59 = arith.mulf %58, %1 : vector<8x8xf32>
    %60 = arith.subf %59, %45 : vector<8x8xf32>
    %cst_29 = arith.constant 0.918938517 : f32
    %61 = vector.broadcast %cst_29 : f32 to vector<8x8xf32>
    %62 = arith.subf %60, %61 : vector<8x8xf32>
    %cst_30 = arith.constant dense<0.000000e+00> : vector<8xf32>
    %63 = vector.multi_reduction <add>, %62, %cst_30 [0] : vector<8x8xf32> to vector<8xf32>
    %64 = vector.shape_cast %63 : vector<8xf32> to vector<1x8xf32>
    %cst_31 = arith.constant 0.693147182 : f32
    %65 = vector.broadcast %cst_31 : f32 to vector<8x8xf32>
    %66 = arith.subf %65, %48 : vector<8x8xf32>
    %cst_32 = arith.constant -2.000000e+00 : f32
    %67 = vector.broadcast %cst_32 : f32 to vector<8x8xf32>
    %68 = arith.mulf %67, %48 : vector<8x8xf32>
    %cst_33 = arith.constant 0.000000e+00 : f32
    %69 = vector.broadcast %cst_33 : f32 to vector<8x8xf32>
    %70 = arith.maximumf %68, %69 : vector<8x8xf32>
    %71 = math.absf %68 : vector<8x8xf32>
    %cst_34 = arith.constant 0.000000e+00 : f32
    %72 = vector.broadcast %cst_34 : f32 to vector<8x8xf32>
    %73 = arith.subf %72, %71 : vector<8x8xf32>
    %74 = math.exp %73 : vector<8x8xf32>
    %75 = math.log1p %74 : vector<8x8xf32>
    %76 = arith.addf %70, %75 : vector<8x8xf32>
    %77 = arith.subf %66, %76 : vector<8x8xf32>
    %cst_35 = arith.constant 2.000000e+00 : f32
    %78 = vector.broadcast %cst_35 : f32 to vector<8x8xf32>
    %79 = arith.mulf %78, %77 : vector<8x8xf32>
    %cst_36 = arith.constant dense<0.000000e+00> : vector<8xf32>
    %80 = vector.multi_reduction <add>, %79, %cst_36 [0] : vector<8x8xf32> to vector<8xf32>
    %81 = vector.shape_cast %80 : vector<8xf32> to vector<1x8xf32>
    %82 = arith.subf %64, %81 : vector<1x8xf32>
    %cst_37 = arith.constant 0.000000e+00 : f32
    %83 = vector.broadcast %cst_37 : f32 to vector<6x8xf32>
    %84 = tpu.concatenate %51, %82, %56, %83 in 0 : vector<8x8xf32>, vector<1x8xf32>, vector<1x8xf32>, vector<6x8xf32> -> vector<16x8xf32>
    %c0_38 = arith.constant 0 : index
    %c0_39 = arith.constant 0 : index
    %85 = vector.load %arg6[%c0_38, %c0_39] : memref<16x8xf32, #tpu.memory_space<vmem>>, vector<16x8xf32>
    tpu.vector_store %arg6[%c0_38, %c0_39], %84 {strides = array<i32>} : memref<16x8xf32, #tpu.memory_space<vmem>>, vector<16x8xf32>,
    return
  }
  func.func @transform_0(%arg0: i32) -> (i32, i32) {
    %c0_i32 = arith.constant 0 : i32
    %c0_i32_0 = arith.constant 0 : i32
    return %c0_i32, %arg0 : i32, i32
  }
  func.func @transform_1(%arg0: i32) -> (i32, i32) {
    %c0_i32 = arith.constant 0 : i32
    %c0_i32_0 = arith.constant 0 : i32
    %c0_i32_1 = arith.constant 0 : i32
    return %c0_i32, %c0_i32_0 : i32, i32
  }
  func.func @transform_2(%arg0: i32) -> (i32, i32) {
    %c0_i32 = arith.constant 0 : i32
    %c0_i32_0 = arith.constant 0 : i32
    %c0_i32_1 = arith.constant 0 : i32
    return %c0_i32, %c0_i32_0 : i32, i32
  }
  func.func @transform_3(%arg0: i32) -> (i32, i32) {
    %c0_i32 = arith.constant 0 : i32
    %c0_i32_0 = arith.constant 0 : i32
    %c0_i32_1 = arith.constant 0 : i32
    return %c0_i32, %c0_i32_0 : i32, i32
  }
  func.func @transform_4(%arg0: i32) -> (i32, i32) {
    %c0_i32 = arith.constant 0 : i32
    %c0_i32_0 = arith.constant 0 : i32
    %c0_i32_1 = arith.constant 0 : i32
    return %c0_i32, %c0_i32_0 : i32, i32
  }
  func.func @transform_5(%arg0: i32) -> (i32, i32) {
    %c0_i32 = arith.constant 0 : i32
    %c0_i32_0 = arith.constant 0 : i32
    return %c0_i32, %arg0 : i32, i32
  }
}

</mosaic_0001>

<llo_original>
// kernel: sac_policy_forward.1
$region0: #{sac_policy_forward.1}
  #allocation0 [shape = 'u32[]', space=smem, size = 0x4, offset = 0x4, fixed_abs, tag = 'smem constant byte address 0x4 - core index']
  #allocation1 [shape = 'u32[144,128]{1,0:T(1,128)}', space=vmem, size = 0x12000, scoped, tag = 'internal scratch']
  %s0 = inlined_call_operand.vmem [shape: f32[24,8], index: 0, kind: input, shape index: {}]
  %s1 = inlined_call_operand.vmem [shape: f32[32,16], index: 1, kind: input, shape index: {}]
  %s2 = inlined_call_operand.vmem [shape: f32[32,32], index: 2, kind: input, shape index: {}]
  %s3 = inlined_call_operand.vmem [shape: f32[16,32], index: 3, kind: input, shape index: {}]
  %s4 = inlined_call_operand.vmem [shape: f32[80,1], index: 4, kind: input, shape index: {}]
  %s5 = inlined_call_operand.vmem [shape: f32[16,8], index: 5, kind: output, shape index: {}]
  %s6 = sld [smem:[#allocation0]]
  $region30: #{sac_policy_forward.1} parent=0
    _
  %s8 = ssub.s32 1, %s6
  %s9 = scalar_select 0, %s8, %s6
  // Predicated region
  $region2: #{sac_policy_forward.1} parent=0 // pred_check
    _
  $region3: #{sac_policy_forward.1} parent=0 // pred_check_branch
    %11 = sbr.rel (0) target = $region5
  $region4: #{sac_policy_forward.1} parent=0 // pred_region
    _
  $region5: #{sac_policy_forward.1} parent=0 // pred_fallthru
    _
  // Predicated region
  $region6: #{sac_policy_forward.1} parent=0 // pred_check
    _
  $region7: #{sac_policy_forward.1} parent=0 // pred_check_branch
    %13 = sbr.rel (0) target = $region9
  $region8: #{sac_policy_forward.1} parent=0 // pred_region
    _
  $region9: #{sac_policy_forward.1} parent=0 // pred_fallthru
    _
  // Predicated region
  $region10: #{sac_policy_forward.1} parent=0 // pred_check
    _
  $region11: #{sac_policy_forward.1} parent=0 // pred_check_branch
    %15 = sbr.rel (0) target = $region13
  $region12: #{sac_policy_forward.1} parent=0 // pred_region
    _
  $region13: #{sac_policy_forward.1} parent=0 // pred_fallthru
    _
  // Predicated region
  $region14: #{sac_policy_forward.1} parent=0 // pred_check
    _
  $region15: #{sac_policy_forward.1} parent=0 // pred_check_branch
    %17 = sbr.rel (0) target = $region17
  $region16: #{sac_policy_forward.1} parent=0 // pred_region
    _
  $region17: #{sac_policy_forward.1} parent=0 // pred_fallthru
    _
  // Predicated region
  $region18: #{sac_policy_forward.1} parent=0 // pred_check
    _
  $region19: #{sac_policy_forward.1} parent=0 // pred_check_branch
    %19 = sbr.rel (0) target = $region21
  $region20: #{sac_policy_forward.1} parent=0 // pred_region
    _
  $region21: #{sac_policy_forward.1} parent=0 // pred_fallthru
    _
  %v20 = vld [vmem:[%s0] sm:$0xff]
  %v21 = vld [vmem:[%s0 + $0x8] sm:$0xff]
  %v22 = vld [vmem:[%s0 + $0x10] sm:$0xff]
  %vm23 = vcmp.ne.f32.partialorder %v20, %v20
  %vm24 = vcmp.ne.f32.partialorder %v21, %v21
  %v25 = vsel %vm23, 0.0, %v20
  %v26 = vsel %vm24, 0.0, %v21
  %v27 = vmax.f32 %v25, -3.4028235e+38
  %v28 = vmax.f32 %v26, -3.4028235e+38
  %v29 = vmin.f32 %v27, 3.4028235e+38
  %v30 = vmin.f32 %v28, 3.4028235e+38
  %v31 = vld [vmem:[%s4] sm:$0xff]
  %v32 = vld [vmem:[%s4 + $0x8] sm:$0xff]
  %v33 = vld [vmem:[%s4 + $0x10] sm:$0xff]
  %v34 = vld [vmem:[%s4 + $0x18] sm:$0xff]
  %v35 = vld [vmem:[%s4 + $0x20] sm:$0xff]
  %v36 = vld [vmem:[%s4 + $0x28] sm:$0xff]
  %v37 = vld [vmem:[%s4 + $0x30] sm:$0xff]
  %v38 = vld [vmem:[%s4 + $0x38] sm:$0xff]
  %v39 = vld [vmem:[%s4 + $0x40] sm:$0xff]
  %v40 = vld [vmem:[%s4 + $0x48] sm:$0xff]
  %v41 = vld [vmem:[%s1] sm:$0xff]
  %v42 = vld [vmem:[%s1 + $0x8] sm:$0xff]
  %v43 = vld [vmem:[%s1 + $0x10] sm:$0xff]
  %v44 = vld [vmem:[%s1 + $0x18] sm:$0xff]
  %46 = vset.pattern.permute.xlu0 0
  %47 = vperm.xlu0 %46, %v31
  %v48 = vpop.permute.xlu0 %47
  %51 = vset.pattern.permute.xlu0 0
  %52 = vperm.xlu0 %51, %v32
  %v53 = vpop.permute.xlu0 %52
  %56 = vset.pattern.permute.xlu0 0
  %57 = vperm.xlu0 %56, %v33
  %v58 = vpop.permute.xlu0 %57
  %61 = vset.pattern.permute.xlu0 0
  %62 = vperm.xlu0 %61, %v34
  %v63 = vpop.permute.xlu0 %62
  %vm65 = vcmask 130048
  %v67 = vsel %vm65, %v41, 0
  %v70 = vsel %vm65, %v42, 0
  %v73 = vsel %vm65, %v43, 0
  %v76 = vsel %vm65, %v44, 0
  %78 = vmatprep.subr.mxu0 0.0
  %79 = vmatpush1.msra.mxu0 %v29
  %80 = vmatprep.subr.mxu0 0.0
  %81 = vmatpush1.msra.mxu0 %v30
  %82 = vmatprep.subr.mxu0 0.0
  %83 = vmatpush1.msra.mxu0 0.0
  %84 = vmatprep.subr.mxu0 0.0
  %85 = vmatpush1.msra.mxu0 0.0
  %86 = vmatprep.subr.mxu0 0.0
  %87 = vmatpush1.msra.mxu0 0.0
  %88 = vmatprep.subr.mxu0 0.0
  %89 = vmatpush1.msra.mxu0 0.0
  %90 = vmatprep.subr.mxu0 0.0
  %91 = vmatpush1.msra.mxu0 0.0
  %92 = vmatprep.subr.mxu0 0.0
  %93 = vmatpush1.msra.mxu0 0.0
  %94 = vmatprep.subr.mxu0 0.0
  %95 = vmatpush1.msra.mxu0 0.0
  %96 = vmatprep.subr.mxu0 0.0
  %97 = vmatpush1.msra.mxu0 0.0
  %98 = vmatprep.subr.mxu0 0.0
  %99 = vmatpush1.msra.mxu0 0.0
  %100 = vmatprep.subr.mxu0 0.0
  %101 = vmatpush1.msra.mxu0 0.0
  %102 = vmatprep.subr.mxu0 0.0
  %103 = vmatpush1.msra.mxu0 0.0
  %104 = vmatprep.subr.mxu0 0.0
  %105 = vmatpush1.msra.mxu0 0.0
  %106 = vmatprep.subr.mxu0 0.0
  %107 = vmatpush1.msra.mxu0 0.0
  %108 = vmatprep.subr.mxu0 0.0
  %109 = vmatpush1.msra.mxu0 0.0
  %110 = vmatprep.subr.mxu0 0.0
  %111 = vmatpush1.msra.mxu0 0.0
  %112 = vmatprep.subr.mxu0 0.0
  %113 = vmatpush1.msra.mxu0 0.0
  %114 = vmatprep.subr.mxu0 0.0
  %115 = vmatpush1.msra.mxu0 0.0
  %116 = vmatprep.subr.mxu0 0.0
  %117 = vmatpush1.msra.mxu0 0.0
  %118 = vmatprep.subr.mxu0 0.0
  %119 = vmatpush1.msra.mxu0 0.0
  %120 = vmatprep.subr.mxu0 0.0
  %121 = vmatpush1.msra.mxu0 0.0
  %122 = vmatprep.subr.mxu0 0.0
  %123 = vmatpush1.msra.mxu0 0.0
  %124 = vmatprep.subr.mxu0 0.0
  %125 = vmatpush1.msra.mxu0 0.0
  %126 = vmatprep.subr.mxu0 0.0
  %127 = vmatpush1.msra.mxu0 0.0
  %128 = vmatprep.subr.mxu0 0.0
  %129 = vmatpush1.msra.mxu0 0.0
  %130 = vmatprep.subr.mxu0 0.0
  %131 = vmatpush1.msra.mxu0 0.0
  %132 = vmatprep.subr.mxu0 0.0
  %133 = vmatpush1.msra.mxu0 0.0
  %134 = vmatprep.subr.mxu0 0.0
  %135 = vmatpush1.msra.mxu0 0.0
  %136 = vmatprep.subr.mxu0 0.0
  %137 = vmatpush1.msra.mxu0 0.0
  %138 = vmatprep.subr.mxu0 0.0
  %139 = vmatpush1.msra.mxu0 0.0
  %140 = vmatprep.subr.mxu0 0.0
  %141 = vmatpush1.msra.mxu0 0.0
  %142 = vmatprep.mubr.f32.mxu0 0.0
  %143 = vmatmul.mubr.f32.gmra.mrb[0].mxu0 %v67
  %v144 = vpop.f32.mrb[0].mxu0
  %v145 = vadd.f32 %v48, %v144
  %v146 = vpop.f32.mrb[0].mxu0
  %147 = vmatprep.mubr.f32.mxu0 0.0
  %148 = vmatmul.mubr.f32.gmra.mrb[0].mxu0 %v70
  %v149 = vpop.f32.mrb[0].mxu0
  %v150 = vadd.f32 %v53, %v149
  %v151 = vpop.f32.mrb[0].mxu0
  %152 = vmatprep.mubr.f32.mxu0 0.0
  %153 = vmatmul.mubr.f32.gmra.mrb[0].mxu0 %v73
  %v154 = vpop.f32.mrb[0].mxu0
  %v155 = vadd.f32 %v58, %v154
  %v156 = vpop.f32.mrb[0].mxu0
  %157 = vmatprep.mubr.f32.mxu0 0.0
  %158 = vmatmul.mubr.f32.gmra.mrb[0].mxu0 %v76
  %v159 = vpop.f32.mrb[0].mxu0
  %v160 = vadd.f32 %v63, %v159
  %v161 = vpop.f32.mrb[0].mxu0
  %162 = vdwg.mxu0
  %vm163 = vcmp.gt.f32.partialorder %v145, 0.0
  %vm164 = vcmp.gt.f32.partialorder %v150, 0.0
  %vm165 = vcmp.gt.f32.partialorder %v155, 0.0
  %vm166 = vcmp.gt.f32.partialorder %v160, 0.0
  %v167 = vmin.f32 %v145, 0.0
  %v168 = vmin.f32 %v150, 0.0
  %v169 = vmin.f32 %v155, 0.0
  %v170 = vmin.f32 %v160, 0.0
  %v171 = vmul.f32 %v167, 1.442695
  %v172 = vpow.pop %v171
  %v173 = vmul.f32 %v168, 1.442695
  %v174 = vpow.pop %v173
  %v175 = vmul.f32 %v169, 1.442695
  %v176 = vpow.pop %v175
  %v177 = vmul.f32 %v170, 1.442695
  %v178 = vpow.pop %v177
  %v179 = vsub.f32 %v172, 1.0
  %v180 = vsub.f32 %v174, 1.0
  %v181 = vsub.f32 %v176, 1.0
  %v182 = vsub.f32 %v178, 1.0
  %v183 = vsel %vm163, %v145, %v179
  %v184 = vsel %vm164, %v150, %v180
  %v185 = vsel %vm165, %v155, %v181
  %v186 = vsel %vm166, %v160, %v182
  %v187 = vld [vmem:[%s2] sm:$0xff]
  %v188 = vld [vmem:[%s2 + $0x8] sm:$0xff]
  %v189 = vld [vmem:[%s2 + $0x10] sm:$0xff]
  %v190 = vld [vmem:[%s2 + $0x18] sm:$0xff]
  %192 = vset.pattern.permute.xlu0 0
  %193 = vperm.xlu0 %192, %v35
  %v194 = vpop.permute.xlu0 %193
  %197 = vset.pattern.permute.xlu0 0
  %198 = vperm.xlu0 %197, %v36
  %v199 = vpop.permute.xlu0 %198
  %202 = vset.pattern.permute.xlu0 0
  %203 = vperm.xlu0 %202, %v37
  %v204 = vpop.permute.xlu0 %203
  %207 = vset.pattern.permute.xlu0 0
  %208 = vperm.xlu0 %207, %v38
  %v209 = vpop.permute.xlu0 %208
  %vm211 = vcmask 261120
  %v213 = vsel %vm211, %v187, 0
  %v216 = vsel %vm211, %v188, 0
  %v219 = vsel %vm211, %v189, 0
  %v222 = vsel %vm211, %v190, 0
  %224 = vmatprep.subr.mxu0 0.0
  %225 = vmatpush1.msra.mxu0 %v183
  %226 = vmatprep.subr.mxu0 0.0
  %227 = vmatpush1.msra.mxu0 %v184
  %228 = vmatprep.subr.mxu0 0.0
  %229 = vmatpush1.msra.mxu0 %v185
  %230 = vmatprep.subr.mxu0 0.0
  %231 = vmatpush1.msra.mxu0 %v186
  %232 = vmatprep.subr.mxu0 0.0
  %233 = vmatpush1.msra.mxu0 0.0
  %234 = vmatprep.subr.mxu0 0.0
  %235 = vmatpush1.msra.mxu0 0.0
  %236 = vmatprep.subr.mxu0 0.0
  %237 = vmatpush1.msra.mxu0 0.0
  %238 = vmatprep.subr.mxu0 0.0
  %239 = vmatpush1.msra.mxu0 0.0
  %240 = vmatprep.subr.mxu0 0.0
  %241 = vmatpush1.msra.mxu0 0.0
  %242 = vmatprep.subr.mxu0 0.0
  %243 = vmatpush1.msra.mxu0 0.0
  %244 = vmatprep.subr.mxu0 0.0
  %245 = vmatpush1.msra.mxu0 0.0
  %246 = vmatprep.subr.mxu0 0.0
  %247 = vmatpush1.msra.mxu0 0.0
  %248 = vmatprep.subr.mxu0 0.0
  %249 = vmatpush1.msra.mxu0 0.0
  %250 = vmatprep.subr.mxu0 0.0
  %251 = vmatpush1.msra.mxu0 0.0
  %252 = vmatprep.subr.mxu0 0.0
  %253 = vmatpush1.msra.mxu0 0.0
  %254 = vmatprep.subr.mxu0 0.0
  %255 = vmatpush1.msra.mxu0 0.0
  %256 = vmatprep.subr.mxu0 0.0
  %257 = vmatpush1.msra.mxu0 0.0
  %258 = vmatprep.subr.mxu0 0.0
  %259 = vmatpush1.msra.mxu0 0.0
  %260 = vmatprep.subr.mxu0 0.0
  %261 = vmatpush1.msra.mxu0 0.0
  %262 = vmatprep.subr.mxu0 0.0
  %263 = vmatpush1.msra.mxu0 0.0
  %264 = vmatprep.subr.mxu0 0.0
  %265 = vmatpush1.msra.mxu0 0.0
  %266 = vmatprep.subr.mxu0 0.0
  %267 = vmatpush1.msra.mxu0 0.0
  %268 = vmatprep.subr.mxu0 0.0
  %269 = vmatpush1.msra.mxu0 0.0
  %270 = vmatprep.subr.mxu0 0.0
  %271 = vmatpush1.msra.mxu0 0.0
  %272 = vmatprep.subr.mxu0 0.0
  %273 = vmatpush1.msra.mxu0 0.0
  %274 = vmatprep.subr.mxu0 0.0
  %275 = vmatpush1.msra.mxu0 0.0
  %276 = vmatprep.subr.mxu0 0.0
  %277 = vmatpush1.msra.mxu0 0.0
  %278 = vmatprep.subr.mxu0 0.0
  %279 = vmatpush1.msra.mxu0 0.0
  %280 = vmatprep.subr.mxu0 0.0
  %281 = vmatpush1.msra.mxu0 0.0
  %282 = vmatprep.subr.mxu0 0.0
  %283 = vmatpush1.msra.mxu0 0.0
  %284 = vmatprep.subr.mxu0 0.0
  %285 = vmatpush1.msra.mxu0 0.0
  %286 = vmatprep.subr.mxu0 0.0
  %287 = vmatpush1.msra.mxu0 0.0
  %288 = vmatprep.mubr.f32.mxu0 0.0
  %289 = vmatmul.mubr.f32.gmra.mrb[0].mxu0 %v213
  %v290 = vpop.f32.mrb[0].mxu0
  %v291 = vadd.f32 %v194, %v290
  %v292 = vpop.f32.mrb[0].mxu0
  %293 = vmatprep.mubr.f32.mxu0 0.0
  %294 = vmatmul.mubr.f32.gmra.mrb[0].mxu0 %v216
  %v295 = vpop.f32.mrb[0].mxu0
  %v296 = vadd.f32 %v199, %v295
  %v297 = vpop.f32.mrb[0].mxu0
  %298 = vmatprep.mubr.f32.mxu0 0.0
  %299 = vmatmul.mubr.f32.gmra.mrb[0].mxu0 %v219
  %v300 = vpop.f32.mrb[0].mxu0
  %v301 = vadd.f32 %v204, %v300
  %v302 = vpop.f32.mrb[0].mxu0
  %303 = vmatprep.mubr.f32.mxu0 0.0
  %304 = vmatmul.mubr.f32.gmra.mrb[0].mxu0 %v222
  %v305 = vpop.f32.mrb[0].mxu0
  %v306 = vadd.f32 %v209, %v305
  %v307 = vpop.f32.mrb[0].mxu0
  %308 = vdwg.mxu0
  %vm309 = vcmp.gt.f32.partialorder %v291, 0.0
  %vm310 = vcmp.gt.f32.partialorder %v296, 0.0
  %vm311 = vcmp.gt.f32.partialorder %v301, 0.0
  %vm312 = vcmp.gt.f32.partialorder %v306, 0.0
  %v313 = vmin.f32 %v291, 0.0
  %v314 = vmin.f32 %v296, 0.0
  %v315 = vmin.f32 %v301, 0.0
  %v316 = vmin.f32 %v306, 0.0
  %v317 = vmul.f32 %v313, 1.442695
  %v318 = vpow.pop %v317
  %v319 = vmul.f32 %v314, 1.442695
  %v320 = vpow.pop %v319
  %v321 = vmul.f32 %v315, 1.442695
  %v322 = vpow.pop %v321
  %v323 = vmul.f32 %v316, 1.442695
  %v324 = vpow.pop %v323
  %v325 = vsub.f32 %v318, 1.0
  %v326 = vsub.f32 %v320, 1.0
  %v327 = vsub.f32 %v322, 1.0
  %v328 = vsub.f32 %v324, 1.0
  %v329 = vsel %vm309, %v291, %v325
  %v330 = vsel %vm310, %v296, %v326
  %v331 = vsel %vm311, %v301, %v327
  %v332 = vsel %vm312, %v306, %v328
  %v333 = vld [vmem:[%s3] sm:$0xff]
  %v334 = vld [vmem:[%s3 + $0x8] sm:$0xff]
  %336 = vset.pattern.permute.xlu0 0
  %337 = vperm.xlu0 %336, %v39
  %v338 = vpop.permute.xlu0 %337
  %341 = vset.pattern.permute.xlu0 0
  %342 = vperm.xlu0 %341, %v40
  %v343 = vpop.permute.xlu0 %342
  %v346 = vsel %vm211, %v333, 0
  %v349 = vsel %vm211, %v334, 0
  %351 = vmatprep.subr.mxu0 0.0
  %352 = vmatpush1.msra.mxu0 %v329
  %353 = vmatprep.subr.mxu0 0.0
  %354 = vmatpush1.msra.mxu0 %v330
  %355 = vmatprep.subr.mxu0 0.0
  %356 = vmatpush1.msra.mxu0 %v331
  %357 = vmatprep.subr.mxu0 0.0
  %358 = vmatpush1.msra.mxu0 %v332
  %359 = vmatprep.subr.mxu0 0.0
  %360 = vmatpush1.msra.mxu0 0.0
  %361 = vmatprep.subr.mxu0 0.0
  %362 = vmatpush1.msra.mxu0 0.0
  %363 = vmatprep.subr.mxu0 0.0
  %364 = vmatpush1.msra.mxu0 0.0
  %365 = vmatprep.subr.mxu0 0.0
  %366 = vmatpush1.msra.mxu0 0.0
  %367 = vmatprep.subr.mxu0 0.0
  %368 = vmatpush1.msra.mxu0 0.0
  %369 = vmatprep.subr.mxu0 0.0
  %370 = vmatpush1.msra.mxu0 0.0
  %371 = vmatprep.subr.mxu0 0.0
  %372 = vmatpush1.msra.mxu0 0.0
  %373 = vmatprep.subr.mxu0 0.0
  %374 = vmatpush1.msra.mxu0 0.0
  %375 = vmatprep.subr.mxu0 0.0
  %376 = vmatpush1.msra.mxu0 0.0
  %377 = vmatprep.subr.mxu0 0.0
  %378 = vmatpush1.msra.mxu0 0.0
  %379 = vmatprep.subr.mxu0 0.0
  %380 = vmatpush1.msra.mxu0 0.0
  %381 = vmatprep.subr.mxu0 0.0
  %382 = vmatpush1.msra.mxu0 0.0
  %383 = vmatprep.subr.mxu0 0.0
  %384 = vmatpush1.msra.mxu0 0.0
  %385 = vmatprep.subr.mxu0 0.0
  %386 = vmatpush1.msra.mxu0 0.0
  %387 = vmatprep.subr.mxu0 0.0
  %388 = vmatpush1.msra.mxu0 0.0
  %389 = vmatprep.subr.mxu0 0.0
  %390 = vmatpush1.msra.mxu0 0.0
  %391 = vmatprep.subr.mxu0 0.0
  %392 = vmatpush1.msra.mxu0 0.0
  %393 = vmatprep.subr.mxu0 0.0
  %394 = vmatpush1.msra.mxu0 0.0
  %395 = vmatprep.subr.mxu0 0.0
  %396 = vmatpush1.msra.mxu0 0.0
  %397 = vmatprep.subr.mxu0 0.0
  %398 = vmatpush1.msra.mxu0 0.0
  %399 = vmatprep.subr.mxu0 0.0
  %400 = vmatpush1.msra.mxu0 0.0
  %401 = vmatprep.subr.mxu0 0.0
  %402 = vmatpush1.msra.mxu0 0.0
  %403 = vmatprep.subr.mxu0 0.0
  %404 = vmatpush1.msra.mxu0 0.0
  %405 = vmatprep.subr.mxu0 0.0
  %406 = vmatpush1.msra.mxu0 0.0
  %407 = vmatprep.subr.mxu0 0.0
  %408 = vmatpush1.msra.mxu0 0.0
  %409 = vmatprep.subr.mxu0 0.0
  %410 = vmatpush1.msra.mxu0 0.0
  %411 = vmatprep.subr.mxu0 0.0
  %412 = vmatpush1.msra.mxu0 0.0
  %413 = vmatprep.subr.mxu0 0.0
  %414 = vmatpush1.msra.mxu0 0.0
  %415 = vmatprep.mubr.f32.mxu0 0.0
  %416 = vmatmul.mubr.f32.gmra.mrb[0].mxu0 %v346
  %v417 = vpop.f32.mrb[0].mxu0
  %v418 = vadd.f32 %v338, %v417
  %v419 = vpop.f32.mrb[0].mxu0
  %420 = vmatprep.mubr.f32.mxu0 0.0
  %421 = vmatmul.mubr.f32.gmra.mrb[0].mxu0 %v349
  %v422 = vpop.f32.mrb[0].mxu0
  %v423 = vadd.f32 %v343, %v422
  %v424 = vpop.f32.mrb[0].mxu0
  %425 = vdwg.mxu0
  %v426 = vmax.f32 %v423, -20.0
  %v427 = vmin.f32 %v426, 2.0
  %v428 = vmul.f32 %v427, 1.442695
  %v429 = vpow.pop %v428
  %v430 = vmul.f32 %v429, %v22
  %v431 = vadd.f32 %v418, %v430
  %v432 = vtanh.pop %v431
  %v433 = vmul.f32 %v432, 50.0
  %v434 = vmul.f32 %v432, %v432
  %vm435 = vcmask 64512
  %v436 = vsel %vm435, %v434, 0.0
  %v437 = vrot.slane %v436, 4
  %v438 = vadd.f32 %v436, %v437
  %v439 = vrot.slane %v438, 2
  %v440 = vadd.f32 %v438, %v439
  %v441 = vrot.slane %v440, 1
  %v442 = vadd.f32 %v440, %v441
  %v443 = vmul.f32 %v442, -0.01
  %v444 = vmul.f32 %v22, -0.5
  %v445 = vmul.f32 %v444, %v22
  %v446 = vsub.f32 %v445, %v427
  %v447 = vsub.f32 %v446, 0.9189385
  %v448 = vsel %vm435, %v447, 0.0
  %v449 = vrot.slane %v448, 4
  %v450 = vadd.f32 %v448, %v449
  %v451 = vrot.slane %v450, 2
  %v452 = vadd.f32 %v450, %v451
  %v453 = vrot.slane %v452, 1
  %v454 = vadd.f32 %v452, %v453
  %v455 = vsub.f32 0.6931472, %v431
  %v456 = vmul.f32 %v431, -2.0
  %v457 = vmax.f32 %v456, 0.0
  %v458 = vand.u32 2147483647, %v456
  %v459 = vsub.f32 0.0, %v458
  %v460 = vmul.f32 %v459, 1.442695
  %v461 = vpow.pop %v460
  %v462 = vadd.f32 %v461, 1.0
  %v463 = vlog2.pop %v462
  %v464 = vmul.f32 %v463, 0.6931472
  %v465 = vmul.f32 -0.5, %v461
  %v466 = vadd.f32 %v465, 1.0
  %v467 = vmul.f32 %v466, %v461
  %v468 = vand.u32 2147483647, %v461
  %vm469 = vcmp.lt.f32.partialorder %v468, 0.0004427343
  %v470 = vsel %vm469, %v467, %v464
  %v471 = vadd.f32 %v457, %v470
  %v472 = vsub.f32 %v455, %v471
  %v473 = vmul.f32 %v472, 2.0
  %v474 = vsel %vm435, %v473, 0.0
  %v475 = vrot.slane %v474, 4
  %v476 = vadd.f32 %v474, %v475
  %v477 = vrot.slane %v476, 2
  %v478 = vadd.f32 %v476, %v477
  %v479 = vrot.slane %v478, 1
  %v480 = vadd.f32 %v478, %v479
  %v481 = vsub.f32 %v454, %v480
  %vm482 = vcmask 1040384
  %v483 = vsel %vm482, %v481, %v443
  %vm484 = vcmask 1041408
  %v485 = vsel %vm484, %v483, 0.0
  %486 = vst.msk [vmem:[%s5] sm:$0xff] %vm435, %v433
  %487 = vst.msk [vmem:[%s5 + $0x8] sm:$0xff] %vm435, %v485
  // Predicated region
  $region22: #{sac_policy_forward.1} parent=0 // pred_check
    _
  $region23: #{sac_policy_forward.1} parent=0 // pred_check_branch
    %489 = sbr.rel (0) target = $region25
  $region24: #{sac_policy_forward.1} parent=0 // pred_region
    _
  $region25: #{sac_policy_forward.1} parent=0 // pred_fallthru
    _
  // Predicated region
  $region26: #{sac_policy_forward.1} parent=0 // pred_check
    _
  $region27: #{sac_policy_forward.1} parent=0 // pred_check_branch
    %491 = sbr.rel (0) target = $region29
  $region28: #{sac_policy_forward.1} parent=0 // pred_region
    _
  $region29: #{sac_policy_forward.1} parent=0 // pred_fallthru
    _

</llo_original>
